<compile_context>
chip_gen: v7x
topology: tpu7x:2x2x1
jax: 0.10.0
libtpu: 0.0.40
codegen_flags: <defaults>
</compile_context>

<pallas_src>
import jax
import jax.numpy as jnp
from jax.experimental import pallas as pl
from jax.experimental.pallas import tpu as pltpu


def _round_up(x, m):
    return (x + m - 1) // m * m


def _lora_kernel(x_ref, w_org_t_ref, w_down_t_ref, w_up_t_ref, b_ref, o_ref,
                 acc_ref, down_ref):
    """Grid = (M//tm, N//tn, K//tk).

    x_ref        : (tm, tk)      row tile of x
    w_org_t_ref  : (tk, tn)      tile of the frozen weight (in-dim major)
    w_down_t_ref : (tk, R)       tile of lora_down weight (R = rank padded to 128)
    w_up_t_ref   : (R, tn)       tile of lora_up weight, pre-scaled by mult*scale
    b_ref        : (1, tn) f32   bias of the frozen module (zeros if none)
    o_ref        : (tm, tn)      output tile
    acc_ref      : (tm, tn) f32  base-matmul accumulator (persists over K)
    down_ref     : (tm, R)  f32  down-projection accumulator (persists over K,
                                 reused across the whole N axis of a row tile)
    """
    j = pl.program_id(1)
    k = pl.program_id(2)
    nk = pl.num_programs(2)

    @pl.when(k == 0)
    def _():
        acc_ref[...] = jnp.zeros_like(acc_ref)

    @pl.when(jnp.logical_and(j == 0, k == 0))
    def _():
        down_ref[...] = jnp.zeros_like(down_ref)

    x = x_ref[...]

    # Frozen base path: accumulate x @ w_org_t over K.
    acc_ref[...] += jnp.dot(x, w_org_t_ref[...],
                            preferred_element_type=jnp.float32)

    # LoRA down path: computed once per row tile (j == 0) and reused for all
    # other N blocks of the same row tile.
    @pl.when(j == 0)
    def _():
        down_ref[...] += jnp.dot(x, w_down_t_ref[...],
                                 preferred_element_type=jnp.float32)

    # Finalize on the last K step: up-projection + bias + add, one lane-dense store.
    @pl.when(k == nk - 1)
    def _():
        up = jnp.dot(down_ref[...].astype(x_ref.dtype), w_up_t_ref[...],
                     preferred_element_type=jnp.float32)
        o_ref[...] = (acc_ref[...] + up + b_ref[...]).astype(o_ref.dtype)


def prepare_lora_weights(w_org, w_down, w_up, *, multiplier, scale, bias=None):
    """One-time weight preparation (hoisted out of the per-call path).

    Inputs (PyTorch layout; Conv2d 1x1 weights must be squeezed to 2-D first):
      w_org  : (out_dim, in_dim)   frozen Linear / 1x1-Conv weight
      w_down : (lora_dim, in_dim)  lora_down weight
      w_up   : (out_dim, lora_dim) lora_up weight
      bias   : (out_dim,) or None  frozen module bias
    Returns in-dim-major, zero-padded weights:
      w_org_t  : (K, N)  K = round_up(in_dim, 128), N = round_up(out_dim, 128)
      w_down_t : (K, R)  R = round_up(lora_dim, 128)
      w_up_t   : (R, N)  pre-scaled by multiplier * scale
      b_row    : (1, N)  f32 bias row (zeros if bias is None)
    """
    out_dim, in_dim = w_org.shape
    lora_dim = w_down.shape[0]
    K = _round_up(in_dim, 128)
    N = _round_up(out_dim, 128)
    R = _round_up(lora_dim, 128)

    w_org_t = jnp.zeros((K, N), w_org.dtype).at[:in_dim, :out_dim].set(w_org.T)
    w_down_t = jnp.zeros((K, R), w_down.dtype).at[:in_dim, :lora_dim].set(w_down.T)
    w_up_scaled = (w_up.astype(jnp.float32) *
                   (float(multiplier) * float(scale))).astype(w_up.dtype)
    w_up_t = jnp.zeros((R, N), w_up.dtype).at[:lora_dim, :out_dim].set(w_up_scaled.T)

    b_row = jnp.zeros((1, N), jnp.float32)
    if bias is not None:
        b_row = b_row.at[0, :out_dim].set(bias.astype(jnp.float32))
    return w_org_t, w_down_t, w_up_t, b_row


def lora_forward(x, w_org_t, w_down_t, w_up_t, b_row, *, out_dim,
                 tile_m=256, tile_n=None, tile_k=None):
    """x: (M, in_dim); weights from prepare_lora_weights. Returns (M, out_dim)."""
    M, in_dim = x.shape
    K, N = w_org_t.shape
    R = w_down_t.shape[1]
    assert w_down_t.shape == (K, R) and w_up_t.shape == (R, N)
    assert b_row.shape == (1, N)
    assert in_dim <= K and out_dim <= N

    # Tile selection: 256-aligned where possible (MXU-native on v6e/v7x),
    # fall back to 128 (v5e MXU width / small layers).
    tm = min(tile_m, _round_up(M, 8))
    tn = tile_n if tile_n is not None else (256 if N % 256 == 0 else 128)
    tn = min(tn, N)
    tk = tile_k if tile_k is not None else (256 if K % 256 == 0 else 128)
    tk = min(tk, K)
    assert N % tn == 0 and K % tk == 0 and tm % 8 == 0

    # Pad M (rows) so any batch*seq*spatial works; pad K columns of x once.
    M_pad = _round_up(M, tm)
    if M_pad != M or K != in_dim:
        x_in = jnp.zeros((M_pad, K), x.dtype).at[:M, :in_dim].set(x)
    else:
        x_in = x

    mt, nt, kt = M_pad // tm, N // tn, K // tk
    grid = (mt, nt, kt)

    # Explicit VMEM budget from the actual tile footprint (inputs/outputs are
    # double-buffered by the pipeline); clamp to 64 MiB so it fits v7x.
    isz = jnp.dtype(x.dtype).itemsize
    wsz = jnp.dtype(w_org_t.dtype).itemsize
    vmem_bytes = (2 * tm * tk * isz
                  + 2 * (tk * tn + tk * R + R * tn) * wsz
                  + 2 * tn * 4
                  + 2 * tm * tn * isz
                  + (tm * tn + tm * R) * 4)
    vmem_limit = int(min(64 << 20, max(32 << 20, 2 * vmem_bytes)))

    out = pl.pallas_call(
        _lora_kernel,
        out_shape=jax.ShapeDtypeStruct((M_pad, N), x.dtype),
        grid_spec=pltpu.PrefetchScalarGridSpec(
            num_scalar_prefetch=0,
            grid=grid,
            in_specs=[
                pl.BlockSpec((tm, tk), lambda i, j, k: (i, k)),
                pl.BlockSpec((tk, tn), lambda i, j, k: (k, j)),
                # lora_down weight is only consumed on j == 0; for j > 0 park
                # the block index on the LAST visited block (kt-1, 0) so no
                # redundant DMA is ever issued across the rest of the row tile.
                pl.BlockSpec((tk, R),
                             lambda i, j, k, kt=kt: (jnp.where(j == 0, k, kt - 1), 0)),
                pl.BlockSpec((R, tn), lambda i, j, k: (0, j)),
                pl.BlockSpec((1, tn), lambda i, j, k: (0, j)),
            ],
            out_specs=pl.BlockSpec((tm, tn), lambda i, j, k: (i, j)),
            scratch_shapes=[
                pltpu.VMEM((tm, tn), jnp.float32),   # base accumulator
                pltpu.VMEM((tm, R), jnp.float32),    # down-projection accumulator
            ],
        ),
        compiler_params=pltpu.CompilerParams(
            # N and K must be "arbitrary": K carries the accumulator, N reuses
            # the down-projection computed at j == 0.  M is megacore-parallel.
            dimension_semantics=("parallel", "arbitrary", "arbitrary"),
            vmem_limit_bytes=vmem_limit,
        ),
    )(x_in, w_org_t, w_down_t, w_up_t, b_row)

    return out[:M, :out_dim]


def lora_conv1x1_forward(x_nchw, w_org_t, w_down_t, w_up_t, b_row, *, out_dim,
                         **kw):
    """1x1-Conv2d branch: flatten spatial positions, reuse the matmul kernel."""
    B, C, H, W = x_nchw.shape
    x2d = jnp.transpose(x_nchw, (0, 2, 3, 1)).reshape(B * H * W, C)
    y2d = lora_forward(x2d, w_org_t, w_down_t, w_up_t, b_row,
                       out_dim=out_dim, **kw)
    return jnp.transpose(y2d.reshape(B, H, W, out_dim), (0, 3, 1, 2))


if __name__ == "__main__":
    key = jax.random.PRNGKey(0)
    (k_x, k_org, k_down, k_b,
     k_xc, k_orgc, k_downc, k_upc, k_bc,
     k_x2, k_org2, k_down2, k_up2) = jax.random.split(key, 13)

    # --- Case 1: Linear branch, faithful to LoRAModule defaults -------------
    batch, seq = 2, 8
    in_dim, out_dim, lora_dim = 32, 32, 4
    alpha, multiplier = 1.0, 1.0
    scale = alpha / lora_dim

    bound = 1.0 / (in_dim ** 0.5)
    w_org = jax.random.uniform(k_org, (out_dim, in_dim), jnp.float32, -bound, bound)
    b_org = jax.random.uniform(k_b, (out_dim,), jnp.float32, -bound, bound)
    w_down = jax.random.uniform(k_down, (lora_dim, in_dim), jnp.float32, -bound, bound)
    w_up = jnp.zeros((out_dim, lora_dim), jnp.float32)   # LoRAModule init: zeros

    x = jax.random.normal(k_x, (batch, seq, in_dim), jnp.float32)
    x2d = x.reshape(batch * seq, in_dim)

    wts = prepare_lora_weights(w_org, w_down, w_up,
                               multiplier=multiplier, scale=scale, bias=b_org)
    out = lora_forward(x2d, *wts, out_dim=out_dim)
    out = jax.block_until_ready(out)

    ref = (x2d @ w_org.T + b_org[None, :]
           + ((x2d @ w_down.T) @ w_up.T) * multiplier * scale)
    assert out.shape == (batch * seq, out_dim)
    assert jnp.allclose(out, ref, atol=1e-5, rtol=1e-5), \
        float(jnp.max(jnp.abs(out - ref)))
    out3d = out.reshape(batch, seq, out_dim)  # restore (batch, seq, out) view
    jax.block_until_ready(out3d)

    # --- Case 2: Conv2d (1x1) branch, non-zero lora_up ----------------------
    B, Cin, Hs, Ws = 2, 4, 16, 16
    Cout, rank_c = 8, 4
    mult_c, scale_c = 0.8, 2.0 / rank_c
    bound_c = 1.0 / (Cin ** 0.5)
    w_org_c = jax.random.uniform(k_orgc, (Cout, Cin), jnp.float32, -bound_c, bound_c)
    b_org_c = jax.random.uniform(k_bc, (Cout,), jnp.float32, -bound_c, bound_c)
    w_down_c = jax.random.uniform(k_downc, (rank_c, Cin), jnp.float32, -bound_c, bound_c)
    w_up_c = jax.random.normal(k_upc, (Cout, rank_c), jnp.float32) * 0.05
    x_nchw = jax.random.normal(k_xc, (B, Cin, Hs, Ws), jnp.float32)

    wts_c = prepare_lora_weights(w_org_c, w_down_c, w_up_c,
                                 multiplier=mult_c, scale=scale_c, bias=b_org_c)
    out_c = lora_conv1x1_forward(x_nchw, *wts_c, out_dim=Cout)
    out_c = jax.block_until_ready(out_c)

    ref_c = (jnp.einsum('bchw,oc->bohw', x_nchw, w_org_c)
             + b_org_c[None, :, None, None]
             + jnp.einsum('brhw,or->bohw',
                          jnp.einsum('bchw,rc->brhw', x_nchw, w_down_c),
                          w_up_c) * mult_c * scale_c)
    assert out_c.shape == (B, Cout, Hs, Ws)
    assert jnp.allclose(out_c, ref_c, atol=1e-4, rtol=1e-4), \
        float(jnp.max(jnp.abs(out_c - ref_c)))

    # --- Case 3: non-divisible dims, no bias; exercises full (M, N, K) grid,
    #             K accumulation, M padding and the N-axis down-proj reuse. ---
    M2, in2, out2, rank2 = 48, 384, 320, 8
    mult2, scale2 = 0.7, 2.0 / rank2
    bound2 = 1.0 / (in2 ** 0.5)
    w_org2 = jax.random.uniform(k_org2, (out2, in2), jnp.float32, -bound2, bound2)
    w_down2 = jax.random.uniform(k_down2, (rank2, in2), jnp.float32, -bound2, bound2)
    w_up2 = jax.random.normal(k_up2, (out2, rank2), jnp.float32) * 0.05
    x2 = jax.random.normal(k_x2, (M2, in2), jnp.float32)

    wt2 = prepare_lora_weights(w_org2, w_down2, w_up2,
                               multiplier=mult2, scale=scale2, bias=None)
    out2_arr = lora_forward(x2, *wt2, out_dim=out2, tile_m=32)
    out2_arr = jax.block_until_ready(out2_arr)

    ref2 = x2 @ w_org2.T + ((x2 @ w_down2.T) @ w_up2.T) * mult2 * scale2
    assert out2_arr.shape == (M2, out2)
    assert jnp.allclose(out2_arr, ref2, atol=5e-3, rtol=5e-3), \
        float(jnp.max(jnp.abs(out2_arr - ref2)))

    print("KERNEL_OK")
</pallas_src>

<mosaic_0001>
module attributes {stable_mosaic.version = 11 : i64} {
  func.func @_lora_kernel(%arg0: i32, %arg1: i32, %arg2: i32, %arg3: memref<16x128xf32, #tpu.memory_space<vmem>>, %arg4: memref<128x128xf32, #tpu.memory_space<vmem>>, %arg5: memref<128x128xf32, #tpu.memory_space<vmem>>, %arg6: memref<128x128xf32, #tpu.memory_space<vmem>>, %arg7: memref<1x128xf32, #tpu.memory_space<vmem>>, %arg8: memref<16x128xf32, #tpu.memory_space<vmem>>, %arg9: memref<16x128xf32, #tpu.memory_space<vmem>>, %arg10: memref<16x128xf32, #tpu.memory_space<vmem>>) attributes {dimension_semantics = [#tpu.dimension_semantics<parallel>, #tpu.dimension_semantics<arbitrary>, #tpu.dimension_semantics<arbitrary>], iteration_bounds = array<i64: 1, 1, 1>, scalar_prefetch = 0 : i64, scratch_operands = 2 : i64, tpu.core_type = #tpu.core_type<tc>, window_params = [{transform_indices = @transform_0, window_bounds = array<i64: 16, 128>}, {transform_indices = @transform_1, window_bounds = array<i64: 128, 128>}, {transform_indices = @transform_2, window_bounds = array<i64: 128, 128>}, {transform_indices = @transform_3, window_bounds = array<i64: 128, 128>}, {transform_indices = @transform_4, window_bounds = array<i64: 1, 128>}, {transform_indices = @transform_5, window_bounds = array<i64: 16, 128>}]} {
    %c0_i32 = arith.constant 0 : i32
    %0 = arith.cmpi eq, %arg2, %c0_i32 : i32
    %1 = arith.extui %0 : i1 to i32
    %c0_i32_0 = arith.constant 0 : i32
    %2 = arith.cmpi ne, %1, %c0_i32_0 : i32
    scf.if %2 {
      %cst_15 = arith.constant 0.000000e+00 : f32
      %20 = vector.broadcast %cst_15 : f32 to vector<16x128xf32>
      %c0_16 = arith.constant 0 : index
      %c0_17 = arith.constant 0 : index
      %21 = vector.load %arg9[%c0_16, %c0_17] : memref<16x128xf32, #tpu.memory_space<vmem>>, vector<16x128xf32>
      tpu.vector_store %arg9[%c0_16, %c0_17], %20 {strides = array<i32>} : memref<16x128xf32, #tpu.memory_space<vmem>>, vector<16x128xf32>,
    } else {
    }
    %c0_i32_1 = arith.constant 0 : i32
    %3 = arith.cmpi eq, %arg1, %c0_i32_1 : i32
    %c0_i32_2 = arith.constant 0 : i32
    %4 = arith.cmpi eq, %arg2, %c0_i32_2 : i32
    %5 = arith.andi %3, %4 : i1
    %6 = arith.extui %5 : i1 to i32
    %c0_i32_3 = arith.constant 0 : i32
    %7 = arith.cmpi ne, %6, %c0_i32_3 : i32
    scf.if %7 {
      %cst_15 = arith.constant 0.000000e+00 : f32
      %20 = vector.broadcast %cst_15 : f32 to vector<16x128xf32>
      %c0_16 = arith.constant 0 : index
      %c0_17 = arith.constant 0 : index
      %21 = vector.load %arg10[%c0_16, %c0_17] : memref<16x128xf32, #tpu.memory_space<vmem>>, vector<16x128xf32>
      tpu.vector_store %arg10[%c0_16, %c0_17], %20 {strides = array<i32>} : memref<16x128xf32, #tpu.memory_space<vmem>>, vector<16x128xf32>,
    } else {
    }
    %c0 = arith.constant 0 : index
    %c0_4 = arith.constant 0 : index
    %8 = vector.load %arg3[%c0, %c0_4] : memref<16x128xf32, #tpu.memory_space<vmem>>, vector<16x128xf32>
    %c0_5 = arith.constant 0 : index
    %c0_6 = arith.constant 0 : index
    %9 = vector.load %arg9[%c0_5, %c0_6] : memref<16x128xf32, #tpu.memory_space<vmem>>, vector<16x128xf32>
    %c0_7 = arith.constant 0 : index
    %c0_8 = arith.constant 0 : index
    %10 = vector.load %arg4[%c0_7, %c0_8] : memref<128x128xf32, #tpu.memory_space<vmem>>, vector<128x128xf32>
    %cst = arith.constant dense<0.000000e+00> : vector<16x128xf32>
    %11 = tpu.matmul %8, %10, %cst {dimension_numbers = #tpu.dot_dimension_numbers<[1], [0], [0], [1], [0, 0, 1, 1], [], []>} : vector<16x128xf32>, vector<128x128xf32>, vector<16x128xf32> -> vector<16x128xf32>
    %12 = arith.addf %9, %11 : vector<16x128xf32>
    %c0_9 = arith.constant 0 : index
    %c0_10 = arith.constant 0 : index
    %13 = vector.load %arg9[%c0_9, %c0_10] : memref<16x128xf32, #tpu.memory_space<vmem>>, vector<16x128xf32>
    tpu.vector_store %arg9[%c0_9, %c0_10], %12 {strides = array<i32>} : memref<16x128xf32, #tpu.memory_space<vmem>>, vector<16x128xf32>,
    %c0_i32_11 = arith.constant 0 : i32
    %14 = arith.cmpi eq, %arg1, %c0_i32_11 : i32
    %15 = arith.extui %14 : i1 to i32
    %c0_i32_12 = arith.constant 0 : i32
    %16 = arith.cmpi ne, %15, %c0_i32_12 : i32
    scf.if %16 {
      %c0_15 = arith.constant 0 : index
      %c0_16 = arith.constant 0 : index
      %20 = vector.load %arg10[%c0_15, %c0_16] : memref<16x128xf32, #tpu.memory_space<vmem>>, vector<16x128xf32>
      %c0_17 = arith.constant 0 : index
      %c0_18 = arith.constant 0 : index
      %21 = vector.load %arg5[%c0_17, %c0_18] : memref<128x128xf32, #tpu.memory_space<vmem>>, vector<128x128xf32>
      %cst_19 = arith.constant dense<0.000000e+00> : vector<16x128xf32>
      %22 = tpu.matmul %8, %21, %cst_19 {dimension_numbers = #tpu.dot_dimension_numbers<[1], [0], [0], [1], [0, 0, 1, 1], [], []>} : vector<16x128xf32>, vector<128x128xf32>, vector<16x128xf32> -> vector<16x128xf32>
      %23 = arith.addf %20, %22 : vector<16x128xf32>
      %c0_20 = arith.constant 0 : index
      %c0_21 = arith.constant 0 : index
      %24 = vector.load %arg10[%c0_20, %c0_21] : memref<16x128xf32, #tpu.memory_space<vmem>>, vector<16x128xf32>
      tpu.vector_store %arg10[%c0_20, %c0_21], %23 {strides = array<i32>} : memref<16x128xf32, #tpu.memory_space<vmem>>, vector<16x128xf32>,
    } else {
    }
    %c0_i32_13 = arith.constant 0 : i32
    %17 = arith.cmpi eq, %arg2, %c0_i32_13 : i32
    %18 = arith.extui %17 : i1 to i32
    %c0_i32_14 = arith.constant 0 : i32
    %19 = arith.cmpi ne, %18, %c0_i32_14 : i32
    scf.if %19 {
      %c0_15 = arith.constant 0 : index
      %c0_16 = arith.constant 0 : index
      %20 = vector.load %arg10[%c0_15, %c0_16] : memref<16x128xf32, #tpu.memory_space<vmem>>, vector<16x128xf32>
      %c0_17 = arith.constant 0 : index
      %c0_18 = arith.constant 0 : index
      %21 = vector.load %arg6[%c0_17, %c0_18] : memref<128x128xf32, #tpu.memory_space<vmem>>, vector<128x128xf32>
      %cst_19 = arith.constant dense<0.000000e+00> : vector<16x128xf32>
      %22 = tpu.matmul %20, %21, %cst_19 {dimension_numbers = #tpu.dot_dimension_numbers<[1], [0], [0], [1], [0, 0, 1, 1], [], []>} : vector<16x128xf32>, vector<128x128xf32>, vector<16x128xf32> -> vector<16x128xf32>
      %c0_20 = arith.constant 0 : index
      %c0_21 = arith.constant 0 : index
      %23 = vector.load %arg9[%c0_20, %c0_21] : memref<16x128xf32, #tpu.memory_space<vmem>>, vector<16x128xf32>
      %24 = arith.addf %23, %22 : vector<16x128xf32>
      %c0_22 = arith.constant 0 : index
      %c0_23 = arith.constant 0 : index
      %25 = vector.load %arg7[%c0_22, %c0_23] : memref<1x128xf32, #tpu.memory_space<vmem>>, vector<1x128xf32>
      %26 = vector.broadcast %25 : vector<1x128xf32> to vector<16x128xf32>
      %27 = arith.addf %24, %26 : vector<16x128xf32>
      %c0_24 = arith.constant 0 : index
      %c0_25 = arith.constant 0 : index
      %28 = vector.load %arg8[%c0_24, %c0_25] : memref<16x128xf32, #tpu.memory_space<vmem>>, vector<16x128xf32>
      tpu.vector_store %arg8[%c0_24, %c0_25], %27 {strides = array<i32>} : memref<16x128xf32, #tpu.memory_space<vmem>>, vector<16x128xf32>,
    } else {
    }
    return
  }
  func.func @transform_0(%arg0: i32, %arg1: i32, %arg2: i32) -> (i32, i32) {
    %c0_i32 = arith.constant 0 : i32
    return %arg0, %arg2 : i32, i32
  }
  func.func @transform_1(%arg0: i32, %arg1: i32, %arg2: i32) -> (i32, i32) {
    %c0_i32 = arith.constant 0 : i32
    return %arg2, %arg1 : i32, i32
  }
  func.func @transform_2(%arg0: i32, %arg1: i32, %arg2: i32) -> (i32, i32) {
    %c0_i32 = arith.constant 0 : i32
    %0 = arith.cmpi eq, %arg1, %c0_i32 : i32
    %c0_i32_0 = arith.constant 0 : i32
    %1 = arith.select %0, %arg2, %c0_i32_0 : i32
    %c0_i32_1 = arith.constant 0 : i32
    %c0_i32_2 = arith.constant 0 : i32
    return %1, %c0_i32_1 : i32, i32
  }
  func.func @transform_3(%arg0: i32, %arg1: i32, %arg2: i32) -> (i32, i32) {
    %c0_i32 = arith.constant 0 : i32
    %c0_i32_0 = arith.constant 0 : i32
    return %c0_i32, %arg1 : i32, i32
  }
  func.func @transform_4(%arg0: i32, %arg1: i32, %arg2: i32) -> (i32, i32) {
    %c0_i32 = arith.constant 0 : i32
    %c0_i32_0 = arith.constant 0 : i32
    return %c0_i32, %arg1 : i32, i32
  }
  func.func @transform_5(%arg0: i32, %arg1: i32, %arg2: i32) -> (i32, i32) {
    %c0_i32 = arith.constant 0 : i32
    return %arg0, %arg1 : i32, i32
  }
}

</mosaic_0001>

<llo_original>
// kernel: tpu_custom_call.1
$region0: #{tpu_custom_call.1}
  #allocation0 [shape = 'u32[]', space=smem, size = 0x4, offset = 0x4, fixed_abs, tag = 'smem constant byte address 0x4 - core index']
  #allocation1 [shape = 'u32[144,128]{1,0:T(1,128)}', space=vmem, size = 0x12000, scoped, tag = 'internal scratch']
  #allocation2 [shape = 'f32[16,128]{1,0:T(8,128)}', space=vmem, size = 0x2000, scoped, tag = 'scratch operand']
  #allocation3 [shape = 'f32[16,128]{1,0:T(8,128)}', space=vmem, size = 0x2000, scoped, tag = 'scratch operand']
  %s0 = inlined_call_operand.hbm [shape: f32[16,128], index: 0, kind: input, shape index: {}]
  %s1 = inlined_call_operand.hbm [shape: f32[128,128], index: 1, kind: input, shape index: {}]
  %s2 = inlined_call_operand.hbm [shape: f32[128,128], index: 2, kind: input, shape index: {}]
  %s3 = inlined_call_operand.hbm [shape: f32[128,128], index: 3, kind: input, shape index: {}]
  %s4 = inlined_call_operand.vmem [shape: f32[1,128], index: 4, kind: input, shape index: {}]
  %s5 = inlined_call_operand.hbm [shape: f32[16,128], index: 5, kind: output, shape index: {}]
  %s6 = sld [smem:[#allocation0]]
  $region62: #{tpu_custom_call.1} parent=0
    _
  %s8 = ssub.s32 1, %s6
  %s9 = scalar_select 0, %s8, %s6
  $region1: #{tpu_custom_call.1} parent=0
    #allocation4 [shape = 'u8[8192]{0}', space=vmem, size = 0x2000, scoped, tag = 'input window, operand 0, single buffered']
    #allocation5 [shape = 's32[1]{0}', space=sflag, size = 0x4, scoped, tag = 'scoped memory for tpu_custom_call.1']
    #allocation6 [shape = 's32[1]{0}', space=sflag, size = 0x4, scoped, tag = 'scoped memory for tpu_custom_call.1']
    #allocation7 [shape = 'u8[65536]{0}', space=vmem, size = 0x10000, scoped, tag = 'input window, operand 1, single buffered']
    #allocation8 [shape = 's32[1]{0}', space=sflag, size = 0x4, scoped, tag = 'scoped memory for tpu_custom_call.1']
    #allocation9 [shape = 'u8[65536]{0}', space=vmem, size = 0x10000, scoped, tag = 'input window, operand 2, single buffered']
    #allocation10 [shape = 'u8[65536]{0}', space=vmem, size = 0x10000, scoped, tag = 'input window, operand 3, single buffered']
    #allocation11 [shape = 's32[1]{0}', space=sflag, size = 0x4, scoped, tag = 'scoped memory for tpu_custom_call.1']
    #allocation12 [shape = 'u8[8192]{0}', space=vmem, size = 0x2000, scoped, tag = 'output window, operand 0, single buffered']
    %10 = vsyncpa [#allocation5], 0
    %11 = vsyncpa [#allocation8], 0
    %12 = vsyncpa [#allocation11], 0
    %13 = vsyncpa [#allocation6], 0
    // Predicated region
    $region2: #{tpu_custom_call.1} parent=1 // pred_check
      _
    $region3: #{tpu_custom_call.1} parent=1 // pred_check_branch
      %15 = sbr.rel (0) target = $region5
    $region4: #{tpu_custom_call.1} parent=1 // pred_region
      %s17 = ssub.s32 256, 256
      %18 = vsyncadd [#allocation5], %s17
      %s19 = sshll.u32 [#allocation4], 4
      %s20 = int_to_ptr.vmem [resolvable:$true] %s19
      %25 = dma.hbm_to_vmem [thread:$0]  %s0, 256, %s20, [#allocation5], 128, 128, 8
    $region5: #{tpu_custom_call.1} parent=1 // pred_fallthru
      _
    // Predicated region
    $region6: #{tpu_custom_call.1} parent=1 // pred_check
      _
    $region7: #{tpu_custom_call.1} parent=1 // pred_check_branch
      %27 = sbr.rel (0) target = $region9
    $region8: #{tpu_custom_call.1} parent=1 // pred_region
      %s29 = ssub.s32 2048, 2048
      %30 = vsyncadd [#allocation8], %s29
      %s31 = sshll.u32 [#allocation7], 4
      %s32 = int_to_ptr.vmem [resolvable:$true] %s31
      %37 = dma.hbm_to_vmem [thread:$0]  %s1, 2048, %s32, [#allocation8], 128, 128, 8
    $region9: #{tpu_custom_call.1} parent=1 // pred_fallthru
      _
    // Predicated region
    $region10: #{tpu_custom_call.1} parent=1 // pred_check
      _
    $region11: #{tpu_custom_call.1} parent=1 // pred_check_branch
      %39 = sbr.rel (0) target = $region13
    $region12: #{tpu_custom_call.1} parent=1 // pred_region
      %p40 = scmp.eq.s32.totalorder 0, 0
      %s41 = scalar_select %p40, 0, 0
      %s42 = smul.u32 16, %s41
      %s44 = ssub.s32 2048, 2048
      %45 = vsyncadd [#allocation8], %s44
      %s46 = smul.addr %s42, 128
      %s47 = scalar_lea.hbm %s2, %s46
      %s48 = sshll.u32 [#allocation9], 4
      %s49 = int_to_ptr.vmem [resolvable:$true] %s48
      %54 = dma.hbm_to_vmem [thread:$0]  %s47, 2048, %s49, [#allocation8], 128, 128, 8
    $region13: #{tpu_custom_call.1} parent=1 // pred_fallthru
      _
    // Predicated region
    $region14: #{tpu_custom_call.1} parent=1 // pred_check
      _
    $region15: #{tpu_custom_call.1} parent=1 // pred_check_branch
      %56 = sbr.rel (0) target = $region17
    $region16: #{tpu_custom_call.1} parent=1 // pred_region
      %s58 = ssub.s32 2048, 2048
      %59 = vsyncadd [#allocation11], %s58
      %s60 = sshll.u32 [#allocation10], 4
      %s61 = int_to_ptr.vmem [resolvable:$true] %s60
      %66 = dma.hbm_to_vmem [thread:$0]  %s3, 2048, %s61, [#allocation11], 128, 128, 8
    $region17: #{tpu_custom_call.1} parent=1 // pred_fallthru
      _
    // Predicated region
    $region18: #{tpu_custom_call.1} parent=1 // pred_check
      _
    $region19: #{tpu_custom_call.1} parent=1 // pred_check_branch
      %68 = sbr.rel (0) target = $region21
    $region20: #{tpu_custom_call.1} parent=1 // pred_region
      _
    $region21: #{tpu_custom_call.1} parent=1 // pred_fallthru
      _
    // Predicated region
    $region22: #{tpu_custom_call.1} parent=1 // pred_check
      _
    $region23: #{tpu_custom_call.1} parent=1 // pred_check_branch
      %70 = sbr.rel (0) target = $region25
    $region24: #{tpu_custom_call.1} parent=1 // pred_region
      %71 = dma.done [#allocation5], 256
    $region25: #{tpu_custom_call.1} parent=1 // pred_fallthru
      _
    // Predicated region
    $region26: #{tpu_custom_call.1} parent=1 // pred_check
      _
    $region27: #{tpu_custom_call.1} parent=1 // pred_check_branch
      %73 = sbr.rel (0) target = $region29
    $region28: #{tpu_custom_call.1} parent=1 // pred_region
      %74 = dma.done [#allocation8], 2048
    $region29: #{tpu_custom_call.1} parent=1 // pred_fallthru
      _
    // Predicated region
    $region30: #{tpu_custom_call.1} parent=1 // pred_check
      _
    $region31: #{tpu_custom_call.1} parent=1 // pred_check_branch
      %76 = sbr.rel (0) target = $region33
    $region32: #{tpu_custom_call.1} parent=1 // pred_region
      %77 = dma.done [#allocation8], 2048
    $region33: #{tpu_custom_call.1} parent=1 // pred_fallthru
      _
    // Predicated region
    $region34: #{tpu_custom_call.1} parent=1 // pred_check
      _
    $region35: #{tpu_custom_call.1} parent=1 // pred_check_branch
      %79 = sbr.rel (0) target = $region37
    $region36: #{tpu_custom_call.1} parent=1 // pred_region
      %80 = dma.done [#allocation11], 2048
    $region37: #{tpu_custom_call.1} parent=1 // pred_fallthru
      _
    %p81 = scmp.eq.s32.totalorder 0, 0
    %s82 = scalar_select %p81, 0, 0
    %s83 = smul.u32 16, %s82
    %p84 = scmp.eq.s32.totalorder 0, 0
    // Predicated region
    $region38: #{tpu_custom_call.1} parent=1 // pred_check
      %p85 = pneg %p84
    $region39: #{tpu_custom_call.1} parent=1 // pred_check_branch
      %87 = sbr.rel (%p85) target = $region41
    $region40: #{tpu_custom_call.1} parent=1 // pred_region
      %88 = vst [vmem:[#allocation2] sm:$0xff] 0.0
      %89 = vst [vmem:[#allocation2 + $0x8] sm:$0xff] 0.0
    $region41: #{tpu_custom_call.1} parent=1 // pred_fallthru
      _
    %p90 = scmp.eq.s32.totalorder 0, 0
    %p91 = pnand %p90, %p84
    %p92 = pneg %p91
    // Predicated region
    $region42: #{tpu_custom_call.1} parent=1 // pred_check
      _
    $region43: #{tpu_custom_call.1} parent=1 // pred_check_branch
      %94 = sbr.rel (%p91) target = $region45
    $region44: #{tpu_custom_call.1} parent=1 // pred_region
      %95 = vst [vmem:[#allocation3] sm:$0xff] 0.0
      %96 = vst [vmem:[#allocation3 + $0x8] sm:$0xff] 0.0
    $region45: #{tpu_custom_call.1} parent=1 // pred_fallthru
      _
    %v97 = vld [vmem:[#allocation4] sm:$0xff]
    %v98 = vld [vmem:[#allocation4 + $0x8] sm:$0xff]
    %v99 = vld [vmem:[#allocation2] sm:$0xff]
    %v100 = vld [vmem:[#allocation2 + $0x8] sm:$0xff]
    %v101 = vld [vmem:[#allocation7] sm:$0xff]
    %v102 = vld [vmem:[#allocation7 + $0x8] sm:$0xff]
    %v103 = vld [vmem:[#allocation7 + $0x10] sm:$0xff]
    %v104 = vld [vmem:[#allocation7 + $0x18] sm:$0xff]
    %v105 = vld [vmem:[#allocation7 + $0x20] sm:$0xff]
    %v106 = vld [vmem:[#allocation7 + $0x28] sm:$0xff]
    %v107 = vld [vmem:[#allocation7 + $0x30] sm:$0xff]
    %v108 = vld [vmem:[#allocation7 + $0x38] sm:$0xff]
    %v109 = vld [vmem:[#allocation7 + $0x40] sm:$0xff]
    %v110 = vld [vmem:[#allocation7 + $0x48] sm:$0xff]
    %v111 = vld [vmem:[#allocation7 + $0x50] sm:$0xff]
    %v112 = vld [vmem:[#allocation7 + $0x58] sm:$0xff]
    %v113 = vld [vmem:[#allocation7 + $0x60] sm:$0xff]
    %v114 = vld [vmem:[#allocation7 + $0x68] sm:$0xff]
    %v115 = vld [vmem:[#allocation7 + $0x70] sm:$0xff]
    %v116 = vld [vmem:[#allocation7 + $0x78] sm:$0xff]
    %117 = vmatprep.subr.mxu0 0.0
    %118 = vmatpush1.msra.mxu0 %v101
    %119 = vmatprep.subr.mxu0 0.0
    %120 = vmatpush1.msra.mxu0 %v102
    %121 = vmatprep.subr.mxu0 0.0
    %122 = vmatpush1.msra.mxu0 %v103
    %123 = vmatprep.subr.mxu0 0.0
    %124 = vmatpush1.msra.mxu0 %v104
    %125 = vmatprep.subr.mxu0 0.0
    %126 = vmatpush1.msra.mxu0 %v105
    %127 = vmatprep.subr.mxu0 0.0
    %128 = vmatpush1.msra.mxu0 %v106
    %129 = vmatprep.subr.mxu0 0.0
    %130 = vmatpush1.msra.mxu0 %v107
    %131 = vmatprep.subr.mxu0 0.0
    %132 = vmatpush1.msra.mxu0 %v108
    %133 = vmatprep.subr.mxu0 0.0
    %134 = vmatpush1.msra.mxu0 %v109
    %135 = vmatprep.subr.mxu0 0.0
    %136 = vmatpush1.msra.mxu0 %v110
    %137 = vmatprep.subr.mxu0 0.0
    %138 = vmatpush1.msra.mxu0 %v111
    %139 = vmatprep.subr.mxu0 0.0
    %140 = vmatpush1.msra.mxu0 %v112
    %141 = vmatprep.subr.mxu0 0.0
    %142 = vmatpush1.msra.mxu0 %v113
    %143 = vmatprep.subr.mxu0 0.0
    %144 = vmatpush1.msra.mxu0 %v114
    %145 = vmatprep.subr.mxu0 0.0
    %146 = vmatpush1.msra.mxu0 %v115
    %147 = vmatprep.subr.mxu0 0.0
    %148 = vmatpush1.msra.mxu0 %v116
    %149 = vmatprep.subr.mxu0 0.0
    %150 = vmatpush1.msra.mxu0 0.0
    %151 = vmatprep.subr.mxu0 0.0
    %152 = vmatpush1.msra.mxu0 0.0
    %153 = vmatprep.subr.mxu0 0.0
    %154 = vmatpush1.msra.mxu0 0.0
    %155 = vmatprep.subr.mxu0 0.0
    %156 = vmatpush1.msra.mxu0 0.0
    %157 = vmatprep.subr.mxu0 0.0
    %158 = vmatpush1.msra.mxu0 0.0
    %159 = vmatprep.subr.mxu0 0.0
    %160 = vmatpush1.msra.mxu0 0.0
    %161 = vmatprep.subr.mxu0 0.0
    %162 = vmatpush1.msra.mxu0 0.0
    %163 = vmatprep.subr.mxu0 0.0
    %164 = vmatpush1.msra.mxu0 0.0
    %165 = vmatprep.subr.mxu0 0.0
    %166 = vmatpush1.msra.mxu0 0.0
    %167 = vmatprep.subr.mxu0 0.0
    %168 = vmatpush1.msra.mxu0 0.0
    %169 = vmatprep.subr.mxu0 0.0
    %170 = vmatpush1.msra.mxu0 0.0
    %171 = vmatprep.subr.mxu0 0.0
    %172 = vmatpush1.msra.mxu0 0.0
    %173 = vmatprep.subr.mxu0 0.0
    %174 = vmatpush1.msra.mxu0 0.0
    %175 = vmatprep.subr.mxu0 0.0
    %176 = vmatpush1.msra.mxu0 0.0
    %177 = vmatprep.subr.mxu0 0.0
    %178 = vmatpush1.msra.mxu0 0.0
    %179 = vmatprep.subr.mxu0 0.0
    %180 = vmatpush1.msra.mxu0 0.0
    %181 = vmatprep.mubr.f32.mxu0 0.0
    %182 = vmatmul.mubr.f32.gmra.mrb[0].mxu0 %v97
    %v183 = vpop.f32.mrb[0].mxu0
    %v184 = vadd.f32 0.0, %v183
    %v185 = vpop.f32.mrb[0].mxu0
    %186 = vmatprep.mubr.f32.mxu0 0.0
    %187 = vmatmul.mubr.f32.gmra.mrb[0].mxu0 %v98
    %v188 = vpop.f32.mrb[0].mxu0
    %v189 = vadd.f32 0.0, %v188
    %v190 = vpop.f32.mrb[0].mxu0
    %191 = vdwg.mxu0
    %v192 = vadd.f32 %v99, %v184
    %v193 = vadd.f32 %v100, %v189
    %194 = vst [vmem:[#allocation2] sm:$0xff] %v192
    %195 = vst [vmem:[#allocation2 + $0x8] sm:$0xff] %v193
    // Predicated region
    $region46: #{tpu_custom_call.1} parent=1 // pred_check
      %p196 = pneg %p90
    $region47: #{tpu_custom_call.1} parent=1 // pred_check_branch
      %198 = sbr.rel (%p196) target = $region49
    $region48: #{tpu_custom_call.1} parent=1 // pred_region
      %v199 = vld [vmem:[#allocation3] sm:$0xff]
      %v200 = vld [vmem:[#allocation3 + $0x8] sm:$0xff]
      %v201 = vld [vmem:[#allocation9] sm:$0xff]
      %v202 = vld [vmem:[#allocation9 + $0x8] sm:$0xff]
      %v203 = vld [vmem:[#allocation9 + $0x10] sm:$0xff]
      %v204 = vld [vmem:[#allocation9 + $0x18] sm:$0xff]
      %v205 = vld [vmem:[#allocation9 + $0x20] sm:$0xff]
      %v206 = vld [vmem:[#allocation9 + $0x28] sm:$0xff]
      %v207 = vld [vmem:[#allocation9 + $0x30] sm:$0xff]
      %v208 = vld [vmem:[#allocation9 + $0x38] sm:$0xff]
      %v209 = vld [vmem:[#allocation9 + $0x40] sm:$0xff]
      %v210 = vld [vmem:[#allocation9 + $0x48] sm:$0xff]
      %v211 = vld [vmem:[#allocation9 + $0x50] sm:$0xff]
      %v212 = vld [vmem:[#allocation9 + $0x58] sm:$0xff]
      %v213 = vld [vmem:[#allocation9 + $0x60] sm:$0xff]
      %v214 = vld [vmem:[#allocation9 + $0x68] sm:$0xff]
      %v215 = vld [vmem:[#allocation9 + $0x70] sm:$0xff]
      %v216 = vld [vmem:[#allocation9 + $0x78] sm:$0xff]
      %217 = vmatprep.subr.mxu0 0.0
      %218 = vmatpush1.msra.mxu0 %v201
      %219 = vmatprep.subr.mxu0 0.0
      %220 = vmatpush1.msra.mxu0 %v202
      %221 = vmatprep.subr.mxu0 0.0
      %222 = vmatpush1.msra.mxu0 %v203
      %223 = vmatprep.subr.mxu0 0.0
      %224 = vmatpush1.msra.mxu0 %v204
      %225 = vmatprep.subr.mxu0 0.0
      %226 = vmatpush1.msra.mxu0 %v205
      %227 = vmatprep.subr.mxu0 0.0
      %228 = vmatpush1.msra.mxu0 %v206
      %229 = vmatprep.subr.mxu0 0.0
      %230 = vmatpush1.msra.mxu0 %v207
      %231 = vmatprep.subr.mxu0 0.0
      %232 = vmatpush1.msra.mxu0 %v208
      %233 = vmatprep.subr.mxu0 0.0
      %234 = vmatpush1.msra.mxu0 %v209
      %235 = vmatprep.subr.mxu0 0.0
      %236 = vmatpush1.msra.mxu0 %v210
      %237 = vmatprep.subr.mxu0 0.0
      %238 = vmatpush1.msra.mxu0 %v211
      %239 = vmatprep.subr.mxu0 0.0
      %240 = vmatpush1.msra.mxu0 %v212
      %241 = vmatprep.subr.mxu0 0.0
      %242 = vmatpush1.msra.mxu0 %v213
      %243 = vmatprep.subr.mxu0 0.0
      %244 = vmatpush1.msra.mxu0 %v214
      %245 = vmatprep.subr.mxu0 0.0
      %246 = vmatpush1.msra.mxu0 %v215
      %247 = vmatprep.subr.mxu0 0.0
      %248 = vmatpush1.msra.mxu0 %v216
      %249 = vmatprep.subr.mxu0 0.0
      %250 = vmatpush1.msra.mxu0 0.0
      %251 = vmatprep.subr.mxu0 0.0
      %252 = vmatpush1.msra.mxu0 0.0
      %253 = vmatprep.subr.mxu0 0.0
      %254 = vmatpush1.msra.mxu0 0.0
      %255 = vmatprep.subr.mxu0 0.0
      %256 = vmatpush1.msra.mxu0 0.0
      %257 = vmatprep.subr.mxu0 0.0
      %258 = vmatpush1.msra.mxu0 0.0
      %259 = vmatprep.subr.mxu0 0.0
      %260 = vmatpush1.msra.mxu0 0.0
      %261 = vmatprep.subr.mxu0 0.0
      %262 = vmatpush1.msra.mxu0 0.0
      %263 = vmatprep.subr.mxu0 0.0
      %264 = vmatpush1.msra.mxu0 0.0
      %265 = vmatprep.subr.mxu0 0.0
      %266 = vmatpush1.msra.mxu0 0.0
      %267 = vmatprep.subr.mxu0 0.0
      %268 = vmatpush1.msra.mxu0 0.0
      %269 = vmatprep.subr.mxu0 0.0
      %270 = vmatpush1.msra.mxu0 0.0
      %271 = vmatprep.subr.mxu0 0.0
      %272 = vmatpush1.msra.mxu0 0.0
      %273 = vmatprep.subr.mxu0 0.0
      %274 = vmatpush1.msra.mxu0 0.0
      %275 = vmatprep.subr.mxu0 0.0
      %276 = vmatpush1.msra.mxu0 0.0
      %277 = vmatprep.subr.mxu0 0.0
      %278 = vmatpush1.msra.mxu0 0.0
      %279 = vmatprep.subr.mxu0 0.0
      %280 = vmatpush1.msra.mxu0 0.0
      %281 = vmatprep.mubr.f32.mxu0 0.0
      %282 = vmatmul.mubr.f32.gmra.mrb[0].mxu0 %v97
      %v283 = vpop.f32.mrb[0].mxu0
      %v284 = vadd.f32 0.0, %v283
      %v285 = vpop.f32.mrb[0].mxu0
      %286 = vmatprep.mubr.f32.mxu0 0.0
      %287 = vmatmul.mubr.f32.gmra.mrb[0].mxu0 %v98
      %v288 = vpop.f32.mrb[0].mxu0
      %v289 = vadd.f32 0.0, %v288
      %v290 = vpop.f32.mrb[0].mxu0
      %291 = vdwg.mxu0
      %v292 = vadd.f32 %v199, %v284
      %v293 = vadd.f32 %v200, %v289
      %294 = vst [vmem:[#allocation3] sm:$0xff] %v292
      %295 = vst [vmem:[#allocation3 + $0x8] sm:$0xff] %v293
    $region49: #{tpu_custom_call.1} parent=1 // pred_fallthru
      _
    // Predicated region
    $region50: #{tpu_custom_call.1} parent=1 // pred_check
      %p296 = pneg %p84
    $region51: #{tpu_custom_call.1} parent=1 // pred_check_branch
      %298 = sbr.rel (%p296) target = $region53
    $region52: #{tpu_custom_call.1} parent=1 // pred_region
      %v299 = vld [vmem:[#allocation3] sm:$0xff]
      %v300 = vld [vmem:[#allocation3 + $0x8] sm:$0xff]
      %v301 = vld [vmem:[#allocation10] sm:$0xff]
      %v302 = vld [vmem:[#allocation10 + $0x8] sm:$0xff]
      %v303 = vld [vmem:[#allocation10 + $0x10] sm:$0xff]
      %v304 = vld [vmem:[#allocation10 + $0x18] sm:$0xff]
      %v305 = vld [vmem:[#allocation10 + $0x20] sm:$0xff]
      %v306 = vld [vmem:[#allocation10 + $0x28] sm:$0xff]
      %v307 = vld [vmem:[#allocation10 + $0x30] sm:$0xff]
      %v308 = vld [vmem:[#allocation10 + $0x38] sm:$0xff]
      %v309 = vld [vmem:[#allocation10 + $0x40] sm:$0xff]
      %v310 = vld [vmem:[#allocation10 + $0x48] sm:$0xff]
      %v311 = vld [vmem:[#allocation10 + $0x50] sm:$0xff]
      %v312 = vld [vmem:[#allocation10 + $0x58] sm:$0xff]
      %v313 = vld [vmem:[#allocation10 + $0x60] sm:$0xff]
      %v314 = vld [vmem:[#allocation10 + $0x68] sm:$0xff]
      %v315 = vld [vmem:[#allocation10 + $0x70] sm:$0xff]
      %v316 = vld [vmem:[#allocation10 + $0x78] sm:$0xff]
      %317 = vmatprep.subr.mxu0 0.0
      %318 = vmatpush1.msra.mxu0 %v301
      %319 = vmatprep.subr.mxu0 0.0
      %320 = vmatpush1.msra.mxu0 %v302
      %321 = vmatprep.subr.mxu0 0.0
      %322 = vmatpush1.msra.mxu0 %v303
      %323 = vmatprep.subr.mxu0 0.0
      %324 = vmatpush1.msra.mxu0 %v304
      %325 = vmatprep.subr.mxu0 0.0
      %326 = vmatpush1.msra.mxu0 %v305
      %327 = vmatprep.subr.mxu0 0.0
      %328 = vmatpush1.msra.mxu0 %v306
      %329 = vmatprep.subr.mxu0 0.0
      %330 = vmatpush1.msra.mxu0 %v307
      %331 = vmatprep.subr.mxu0 0.0
      %332 = vmatpush1.msra.mxu0 %v308
      %333 = vmatprep.subr.mxu0 0.0
      %334 = vmatpush1.msra.mxu0 %v309
      %335 = vmatprep.subr.mxu0 0.0
      %336 = vmatpush1.msra.mxu0 %v310
      %337 = vmatprep.subr.mxu0 0.0
      %338 = vmatpush1.msra.mxu0 %v311
      %339 = vmatprep.subr.mxu0 0.0
      %340 = vmatpush1.msra.mxu0 %v312
      %341 = vmatprep.subr.mxu0 0.0
      %342 = vmatpush1.msra.mxu0 %v313
      %343 = vmatprep.subr.mxu0 0.0
      %344 = vmatpush1.msra.mxu0 %v314
      %345 = vmatprep.subr.mxu0 0.0
      %346 = vmatpush1.msra.mxu0 %v315
      %347 = vmatprep.subr.mxu0 0.0
      %348 = vmatpush1.msra.mxu0 %v316
      %349 = vmatprep.subr.mxu0 0.0
      %350 = vmatpush1.msra.mxu0 0.0
      %351 = vmatprep.subr.mxu0 0.0
      %352 = vmatpush1.msra.mxu0 0.0
      %353 = vmatprep.subr.mxu0 0.0
      %354 = vmatpush1.msra.mxu0 0.0
      %355 = vmatprep.subr.mxu0 0.0
      %356 = vmatpush1.msra.mxu0 0.0
      %357 = vmatprep.subr.mxu0 0.0
      %358 = vmatpush1.msra.mxu0 0.0
      %359 = vmatprep.subr.mxu0 0.0
      %360 = vmatpush1.msra.mxu0 0.0
      %361 = vmatprep.subr.mxu0 0.0
      %362 = vmatpush1.msra.mxu0 0.0
      %363 = vmatprep.subr.mxu0 0.0
      %364 = vmatpush1.msra.mxu0 0.0
      %365 = vmatprep.subr.mxu0 0.0
      %366 = vmatpush1.msra.mxu0 0.0
      %367 = vmatprep.subr.mxu0 0.0
      %368 = vmatpush1.msra.mxu0 0.0
      %369 = vmatprep.subr.mxu0 0.0
      %370 = vmatpush1.msra.mxu0 0.0
      %371 = vmatprep.subr.mxu0 0.0
      %372 = vmatpush1.msra.mxu0 0.0
      %373 = vmatprep.subr.mxu0 0.0
      %374 = vmatpush1.msra.mxu0 0.0
      %375 = vmatprep.subr.mxu0 0.0
      %376 = vmatpush1.msra.mxu0 0.0
      %377 = vmatprep.subr.mxu0 0.0
      %378 = vmatpush1.msra.mxu0 0.0
      %379 = vmatprep.subr.mxu0 0.0
      %380 = vmatpush1.msra.mxu0 0.0
      %381 = vmatprep.mubr.f32.mxu0 0.0
      %382 = vmatmul.mubr.f32.gmra.mrb[0].mxu0 %v299
      %v383 = vpop.f32.mrb[0].mxu0
      %v384 = vadd.f32 0.0, %v383
      %v385 = vpop.f32.mrb[0].mxu0
      %386 = vmatprep.mubr.f32.mxu0 0.0
      %387 = vmatmul.mubr.f32.gmra.mrb[0].mxu0 %v300
      %v388 = vpop.f32.mrb[0].mxu0
      %v389 = vadd.f32 0.0, %v388
      %v390 = vpop.f32.mrb[0].mxu0
      %391 = vdwg.mxu0
      %v392 = vld [vmem:[#allocation2] sm:$0xff]
      %v393 = vld [vmem:[#allocation2 + $0x8] sm:$0xff]
      %v394 = vadd.f32 %v392, %v384
      %v395 = vadd.f32 %v393, %v389
      %v396 = vld [vmem:[%s4] sm:$0x1]
      %v398 = vlaneseq
      %v399 = vshrl.u32 %v398, 7
      %v400 = vsub.s32 0, %v399
      %v401 = vrot.slane %v396, %v400
      %v403 = vadd.f32 %v394, %v401
      %v404 = vadd.f32 %v395, %v401
      %405 = vst [vmem:[#allocation12] sm:$0xff] %v403
      %406 = vst [vmem:[#allocation12 + $0x8] sm:$0xff] %v404
    $region53: #{tpu_custom_call.1} parent=1 // pred_fallthru
      _
    // Predicated region
    $region54: #{tpu_custom_call.1} parent=1 // pred_check
      _
    $region55: #{tpu_custom_call.1} parent=1 // pred_check_branch
      %408 = sbr.rel (0) target = $region57
    $region56: #{tpu_custom_call.1} parent=1 // pred_region
      %s410 = ssub.s32 256, 256
      %411 = vsyncadd [#allocation6], %s410
      %s412 = sshll.u32 [#allocation12], 4
      %s413 = int_to_ptr.vmem [resolvable:$true] %s412
      %418 = dma.vmem_to_hbm [thread:$0]  %s413, 256, %s5, [#allocation6], 128, 128, 8
    $region57: #{tpu_custom_call.1} parent=1 // pred_fallthru
      _
    // Predicated region
    $region58: #{tpu_custom_call.1} parent=1 // pred_check
      _
    $region59: #{tpu_custom_call.1} parent=1 // pred_check_branch
      %420 = sbr.rel (0) target = $region61
    $region60: #{tpu_custom_call.1} parent=1 // pred_region
      %421 = dma.done [#allocation6], 256
    $region61: #{tpu_custom_call.1} parent=1 // pred_fallthru
      _
    %422 = vsyncpa [#allocation5], 1
    %423 = vsyncpa [#allocation8], 1
    %424 = vsyncpa [#allocation11], 1
    %425 = vsyncpa [#allocation6], 1

</llo_original>
